<compile_context>
chip_gen: v7x
topology: tpu7x:2x2x1
jax: 0.10.0
libtpu: 0.0.40
codegen_flags: <defaults>
</compile_context>

<pallas_src>
import jax
import jax.numpy as jnp
from jax.experimental import pallas as pl
from jax.experimental.pallas import tpu as pltpu


def _round_up(n, m):
    return ((n + m - 1) // m) * m


def _block_diag(W, pack):
    """pack copies of W (in, out) on the diagonal -> (pack*in, pack*out)."""
    if pack == 1:
        return W
    d_in, d_out = W.shape
    out = jnp.zeros((pack * d_in, pack * d_out), W.dtype)
    for p in range(pack):
        out = out.at[p * d_in:(p + 1) * d_in, p * d_out:(p + 1) * d_out].set(W)
    return out


def _default_pack_lanes():
    """Native MXU K width: 256 on v6e/v7x (2x256^2 MXU), 128 on v5e/older."""
    try:
        kind = jax.devices()[0].device_kind.lower()
    except Exception:
        return 128
    return 256 if any(t in kind for t in ("v6", "v7", "7x")) else 128


def mlp_kernel(*refs):
    # refs = (x_ref, w1, b1, w2, b2, ..., wN, bN, o_ref)
    x_ref, o_ref = refs[0], refs[-1]
    wb = refs[1:-1]
    n_layers = len(wb) // 2

    # TODO(synk): nn.Dropout is an inference-time identity (eval mode); omitted.
    h = x_ref[...]
    for l in range(n_layers):
        w_ref, b_ref = wb[2 * l], wb[2 * l + 1]
        # bf16 operands -> single-pass MXU matmul; accumulate in f32.
        h = jnp.dot(h.astype(jnp.bfloat16), w_ref[...],
                    preferred_element_type=jnp.float32) + b_ref[...]
        if l < n_layers - 1:
            h = jnp.maximum(h, 0.0)               # ReLU (bias add / ReLU in f32)

    # Fold the packed-row axis into lanes before the sigmoid -> dense EUP/VPU
    # work and unmasked, lane-dense stores / writeback DMA.
    o_ref[...] = jax.nn.sigmoid(h.reshape(o_ref.shape)).astype(o_ref.dtype)


def mlp_forward(x, params, *, tb=4096, pack_lanes=None):
    """x: (B, D_in). params: list of (W, b) with W (in, out), b (1, out).

    tb:          batch-tile size in *packed* rows (each packed row carries
                 `pack` batch samples).
    pack_lanes:  lane width the input rows are packed to (auto: 256 on
                 v6e/v7x, 128 otherwise).
    """
    B, D = x.shape
    if pack_lanes is None:
        pack_lanes = _default_pack_lanes()

    # How many independent batch rows share one packed, lane-dense row.
    pack = pack_lanes // D if (D < pack_lanes and pack_lanes % D == 0) else 1
    rows = -(-B // pack)                                  # packed rows needed

    # Lane width of the output slab (>= 128 whenever the batch is big enough;
    # tiny batches keep the narrow layout so padding stays minimal).
    if rows * pack >= 8 * 512:
        out_lanes = 512
    elif rows * pack >= 8 * 128:
        out_lanes = 128
    else:
        out_lanes = pack

    # Row alignment so both the input block (sublane % 8) and the folded output
    # block ((tb*pack/out_lanes) % 8, lane = full dim) stay legal when grid > 1.
    align = max(8, (8 * out_lanes) // pack) if out_lanes > pack else 8

    tb_eff = _round_up(max(1, min(tb, rows)), align)
    # Keep >= 2 grid steps for mid/large batches: v7x's two TensorCores both
    # get work and the DMA/compute pipeline has something to overlap.
    if _round_up(rows, tb_eff) // tb_eff < 2 and rows >= 2 * align:
        tb_eff = _round_up(-(-rows // 2), align)
    rows_pad = _round_up(rows, tb_eff)

    # Pad batch (zeros; sliced off at the end) and make the input lane-dense.
    b_pad = rows_pad * pack
    if b_pad != B:
        x = jnp.pad(x, ((0, b_pad - B), (0, 0)))
    xp = x.reshape(rows_pad, pack * D)

    # Pre-pack weights block-diagonally (once, tiny matrices) in bf16;
    # biases stay f32 (they are added to the f32 accumulator).
    flat = [xp]
    in_specs = [pl.BlockSpec((tb_eff, pack * D), lambda i: (i, 0))]
    for W, b in params:
        Wp = _block_diag(W.astype(jnp.bfloat16), pack)
        bp = jnp.tile(b.astype(jnp.float32).reshape(1, -1), (1, pack))
        flat.extend([Wp, bp])
        # Full-array blocks + constant index_map -> resident in VMEM.
        in_specs.append(pl.BlockSpec(Wp.shape, lambda i: (0, 0)))
        in_specs.append(pl.BlockSpec(bp.shape, lambda i: (0, 0)))

    out_rows_blk = (tb_eff * pack) // out_lanes
    out_rows = (rows_pad * pack) // out_lanes
    grid = (rows_pad // tb_eff,)

    out = pl.pallas_call(
        mlp_kernel,
        out_shape=jax.ShapeDtypeStruct((out_rows, out_lanes), jnp.float32),
        grid=grid,
        in_specs=in_specs,
        out_specs=pl.BlockSpec((out_rows_blk, out_lanes), lambda i: (i, 0)),
        compiler_params=pltpu.CompilerParams(
            dimension_semantics=("parallel",),        # shards grid over v7x's 2 TCs
            vmem_limit_bytes=32 * 1024 * 1024,
        ),
    )(*flat)

    # Row-major order of the packed output == original sample order.
    return out.reshape(rows_pad * pack, 1)[:B]


def mlp_reference(x, params):
    """Pure-JAX f32 reference of the PyTorch forward (eval mode)."""
    h = x.astype(jnp.float32)
    for i, (W, b) in enumerate(params):
        h = h @ W + b
        if i < len(params) - 1:
            h = jnp.maximum(h, 0.0)
    return jax.nn.sigmoid(h)


def init_params(key, input_size, hidden_dims=(16, 8, 4)):
    """Deterministic synthetic parameters (same shapes as the PyTorch module)."""
    dims = [input_size] + list(hidden_dims) + [1]
    params = []
    for i in range(len(dims) - 1):
        in_d, out_d = dims[i], dims[i + 1]
        key, kw, kb = jax.random.split(key, 3)
        bound = 1.0 / jnp.sqrt(in_d)
        # Stored as (in, out): kernel computes x @ W + b (== PyTorch x @ W_pt.T + b).
        W = jax.random.uniform(kw, (in_d, out_d), jnp.float32, -bound, bound)
        b = jax.random.uniform(kb, (1, out_d), jnp.float32, -bound, bound)
        params.append((W, b))
    return params


if __name__ == "__main__":
    key = jax.random.PRNGKey(0)
    k_x, k_p, k_x2 = jax.random.split(key, 3)

    batch, input_size = 2, 32
    x = jax.random.normal(k_x, (batch, input_size), dtype=jnp.float32)
    params = init_params(k_p, input_size, hidden_dims=(16, 8, 4))

    out = mlp_forward(x, params)
    jax.block_until_ready(out)
    assert out.shape == (batch, 1)
    assert out.dtype == jnp.float32
    assert bool(jnp.all((out >= 0.0) & (out <= 1.0)))
    # bf16 matmul operands -> loosened tolerance vs the f32 reference.
    assert bool(jnp.allclose(out, mlp_reference(x, params), atol=2e-2, rtol=2e-2))

    # Larger batch to exercise the multi-tile (grid >= 2), lane-dense-output path.
    x2 = jax.random.normal(k_x2, (8229, input_size), dtype=jnp.float32)
    out2 = mlp_forward(x2, params)
    jax.block_until_ready(out2)
    assert out2.shape == (8229, 1)
    assert bool(jnp.all((out2 >= 0.0) & (out2 <= 1.0)))
    assert bool(jnp.allclose(out2, mlp_reference(x2, params), atol=2e-2, rtol=2e-2))

    print("KERNEL_OK")
</pallas_src>

<mosaic_0001>
module attributes {stable_mosaic.version = 11 : i64} {
  func.func @mlp_kernel(%arg0: i32, %arg1: memref<8x128xf32, #tpu.memory_space<vmem>>, %arg2: memref<128x64xbf16, #tpu.memory_space<vmem>>, %arg3: memref<1x64xf32, #tpu.memory_space<vmem>>, %arg4: memref<64x32xbf16, #tpu.memory_space<vmem>>, %arg5: memref<1x32xf32, #tpu.memory_space<vmem>>, %arg6: memref<32x16xbf16, #tpu.memory_space<vmem>>, %arg7: memref<1x16xf32, #tpu.memory_space<vmem>>, %arg8: memref<16x4xbf16, #tpu.memory_space<vmem>>, %arg9: memref<1x4xf32, #tpu.memory_space<vmem>>, %arg10: memref<8x4xf32, #tpu.memory_space<vmem>>) attributes {dimension_semantics = [#tpu.dimension_semantics<parallel>], iteration_bounds = array<i64: 1>, scalar_prefetch = 0 : i64, scratch_operands = 0 : i64, tpu.core_type = #tpu.core_type<tc>, window_params = [{transform_indices = @transform_0, window_bounds = array<i64: 8, 128>}, {pipeline_mode = #tpu.pipeline_mode<synchronous>, transform_indices = @transform_1, window_bounds = array<i64: 128, 64>}, {pipeline_mode = #tpu.pipeline_mode<synchronous>, transform_indices = @transform_2, window_bounds = array<i64: 1, 64>}, {pipeline_mode = #tpu.pipeline_mode<synchronous>, transform_indices = @transform_3, window_bounds = array<i64: 64, 32>}, {pipeline_mode = #tpu.pipeline_mode<synchronous>, transform_indices = @transform_4, window_bounds = array<i64: 1, 32>}, {pipeline_mode = #tpu.pipeline_mode<synchronous>, transform_indices = @transform_5, window_bounds = array<i64: 32, 16>}, {pipeline_mode = #tpu.pipeline_mode<synchronous>, transform_indices = @transform_6, window_bounds = array<i64: 1, 16>}, {pipeline_mode = #tpu.pipeline_mode<synchronous>, transform_indices = @transform_7, window_bounds = array<i64: 16, 4>}, {pipeline_mode = #tpu.pipeline_mode<synchronous>, transform_indices = @transform_8, window_bounds = array<i64: 1, 4>}, {transform_indices = @transform_9, window_bounds = array<i64: 8, 4>}]} {
    %c0 = arith.constant 0 : index
    %c0_0 = arith.constant 0 : index
    %0 = vector.load %arg1[%c0, %c0_0] : memref<8x128xf32, #tpu.memory_space<vmem>>, vector<8x128xf32>
    %1 = arith.truncf %0 : vector<8x128xf32> to vector<8x128xbf16>
    %c0_1 = arith.constant 0 : index
    %c0_2 = arith.constant 0 : index
    %2 = vector.load %arg2[%c0_1, %c0_2] : memref<128x64xbf16, #tpu.memory_space<vmem>>, vector<128x64xbf16>
    %cst = arith.constant dense<0.000000e+00> : vector<8x64xf32>
    %3 = tpu.matmul %1, %2, %cst {dimension_numbers = #tpu.dot_dimension_numbers<[1], [0], [0], [1], [0, 0, 1, 1], [], []>} : vector<8x128xbf16>, vector<128x64xbf16>, vector<8x64xf32> -> vector<8x64xf32>
    %c0_3 = arith.constant 0 : index
    %c0_4 = arith.constant 0 : index
    %4 = vector.load %arg3[%c0_3, %c0_4] : memref<1x64xf32, #tpu.memory_space<vmem>>, vector<1x64xf32>
    %5 = vector.broadcast %4 : vector<1x64xf32> to vector<8x64xf32>
    %6 = arith.addf %3, %5 : vector<8x64xf32>
    %cst_5 = arith.constant 0.000000e+00 : f32
    %7 = vector.broadcast %cst_5 : f32 to vector<8x64xf32>
    %8 = arith.maximumf %6, %7 : vector<8x64xf32>
    %9 = arith.truncf %8 : vector<8x64xf32> to vector<8x64xbf16>
    %c0_6 = arith.constant 0 : index
    %c0_7 = arith.constant 0 : index
    %10 = vector.load %arg4[%c0_6, %c0_7] : memref<64x32xbf16, #tpu.memory_space<vmem>>, vector<64x32xbf16>
    %cst_8 = arith.constant dense<0.000000e+00> : vector<8x32xf32>
    %11 = tpu.matmul %9, %10, %cst_8 {dimension_numbers = #tpu.dot_dimension_numbers<[1], [0], [0], [1], [0, 0, 1, 1], [], []>} : vector<8x64xbf16>, vector<64x32xbf16>, vector<8x32xf32> -> vector<8x32xf32>
    %c0_9 = arith.constant 0 : index
    %c0_10 = arith.constant 0 : index
    %12 = vector.load %arg5[%c0_9, %c0_10] : memref<1x32xf32, #tpu.memory_space<vmem>>, vector<1x32xf32>
    %13 = vector.broadcast %12 : vector<1x32xf32> to vector<8x32xf32>
    %14 = arith.addf %11, %13 : vector<8x32xf32>
    %cst_11 = arith.constant 0.000000e+00 : f32
    %15 = vector.broadcast %cst_11 : f32 to vector<8x32xf32>
    %16 = arith.maximumf %14, %15 : vector<8x32xf32>
    %17 = arith.truncf %16 : vector<8x32xf32> to vector<8x32xbf16>
    %c0_12 = arith.constant 0 : index
    %c0_13 = arith.constant 0 : index
    %18 = vector.load %arg6[%c0_12, %c0_13] : memref<32x16xbf16, #tpu.memory_space<vmem>>, vector<32x16xbf16>
    %cst_14 = arith.constant dense<0.000000e+00> : vector<8x16xf32>
    %19 = tpu.matmul %17, %18, %cst_14 {dimension_numbers = #tpu.dot_dimension_numbers<[1], [0], [0], [1], [0, 0, 1, 1], [], []>} : vector<8x32xbf16>, vector<32x16xbf16>, vector<8x16xf32> -> vector<8x16xf32>
    %c0_15 = arith.constant 0 : index
    %c0_16 = arith.constant 0 : index
    %20 = vector.load %arg7[%c0_15, %c0_16] : memref<1x16xf32, #tpu.memory_space<vmem>>, vector<1x16xf32>
    %21 = vector.broadcast %20 : vector<1x16xf32> to vector<8x16xf32>
    %22 = arith.addf %19, %21 : vector<8x16xf32>
    %cst_17 = arith.constant 0.000000e+00 : f32
    %23 = vector.broadcast %cst_17 : f32 to vector<8x16xf32>
    %24 = arith.maximumf %22, %23 : vector<8x16xf32>
    %25 = arith.truncf %24 : vector<8x16xf32> to vector<8x16xbf16>
    %c0_18 = arith.constant 0 : index
    %c0_19 = arith.constant 0 : index
    %26 = vector.load %arg8[%c0_18, %c0_19] : memref<16x4xbf16, #tpu.memory_space<vmem>>, vector<16x4xbf16>
    %cst_20 = arith.constant dense<0.000000e+00> : vector<8x4xf32>
    %27 = tpu.matmul %25, %26, %cst_20 {dimension_numbers = #tpu.dot_dimension_numbers<[1], [0], [0], [1], [0, 0, 1, 1], [], []>} : vector<8x16xbf16>, vector<16x4xbf16>, vector<8x4xf32> -> vector<8x4xf32>
    %c0_21 = arith.constant 0 : index
    %c0_22 = arith.constant 0 : index
    %28 = vector.load %arg9[%c0_21, %c0_22] : memref<1x4xf32, #tpu.memory_space<vmem>>, vector<1x4xf32>
    %29 = vector.broadcast %28 : vector<1x4xf32> to vector<8x4xf32>
    %30 = arith.addf %27, %29 : vector<8x4xf32>
    %31 = arith.negf %30 : vector<8x4xf32>
    %32 = math.exp %31 : vector<8x4xf32>
    %cst_23 = arith.constant 1.000000e+00 : f32
    %33 = vector.broadcast %cst_23 : f32 to vector<8x4xf32>
    %34 = arith.addf %33, %32 : vector<8x4xf32>
    %35 = arith.divf %33, %34 : vector<8x4xf32>
    %c0_24 = arith.constant 0 : index
    %c0_25 = arith.constant 0 : index
    %36 = vector.load %arg10[%c0_24, %c0_25] : memref<8x4xf32, #tpu.memory_space<vmem>>, vector<8x4xf32>
    tpu.vector_store %arg10[%c0_24, %c0_25], %35 {strides = array<i32>} : memref<8x4xf32, #tpu.memory_space<vmem>>, vector<8x4xf32>,
    return
  }
  func.func @transform_0(%arg0: i32) -> (i32, i32) {
    %c0_i32 = arith.constant 0 : i32
    %c0_i32_0 = arith.constant 0 : i32
    return %arg0, %c0_i32 : i32, i32
  }
  func.func @transform_1(%arg0: i32) -> (i32, i32) {
    %c0_i32 = arith.constant 0 : i32
    %c0_i32_0 = arith.constant 0 : i32
    %c0_i32_1 = arith.constant 0 : i32
    return %c0_i32, %c0_i32_0 : i32, i32
  }
  func.func @transform_2(%arg0: i32) -> (i32, i32) {
    %c0_i32 = arith.constant 0 : i32
    %c0_i32_0 = arith.constant 0 : i32
    %c0_i32_1 = arith.constant 0 : i32
    return %c0_i32, %c0_i32_0 : i32, i32
  }
  func.func @transform_3(%arg0: i32) -> (i32, i32) {
    %c0_i32 = arith.constant 0 : i32
    %c0_i32_0 = arith.constant 0 : i32
    %c0_i32_1 = arith.constant 0 : i32
    return %c0_i32, %c0_i32_0 : i32, i32
  }
  func.func @transform_4(%arg0: i32) -> (i32, i32) {
    %c0_i32 = arith.constant 0 : i32
    %c0_i32_0 = arith.constant 0 : i32
    %c0_i32_1 = arith.constant 0 : i32
    return %c0_i32, %c0_i32_0 : i32, i32
  }
  func.func @transform_5(%arg0: i32) -> (i32, i32) {
    %c0_i32 = arith.constant 0 : i32
    %c0_i32_0 = arith.constant 0 : i32
    %c0_i32_1 = arith.constant 0 : i32
    return %c0_i32, %c0_i32_0 : i32, i32
  }
  func.func @transform_6(%arg0: i32) -> (i32, i32) {
    %c0_i32 = arith.constant 0 : i32
    %c0_i32_0 = arith.constant 0 : i32
    %c0_i32_1 = arith.constant 0 : i32
    return %c0_i32, %c0_i32_0 : i32, i32
  }
  func.func @transform_7(%arg0: i32) -> (i32, i32) {
    %c0_i32 = arith.constant 0 : i32
    %c0_i32_0 = arith.constant 0 : i32
    %c0_i32_1 = arith.constant 0 : i32
    return %c0_i32, %c0_i32_0 : i32, i32
  }
  func.func @transform_8(%arg0: i32) -> (i32, i32) {
    %c0_i32 = arith.constant 0 : i32
    %c0_i32_0 = arith.constant 0 : i32
    %c0_i32_1 = arith.constant 0 : i32
    return %c0_i32, %c0_i32_0 : i32, i32
  }
  func.func @transform_9(%arg0: i32) -> (i32, i32) {
    %c0_i32 = arith.constant 0 : i32
    %c0_i32_0 = arith.constant 0 : i32
    return %arg0, %c0_i32 : i32, i32
  }
}

</mosaic_0001>

<llo_original>
// kernel: tpu_custom_call.1
$region0: #{tpu_custom_call.1}
  #allocation0 [shape = 'u32[]', space=smem, size = 0x4, offset = 0x4, fixed_abs, tag = 'smem constant byte address 0x4 - core index']
  #allocation1 [shape = 'u32[144,128]{1,0:T(1,128)}', space=vmem, size = 0x12000, scoped, tag = 'internal scratch']
  %s0 = inlined_call_operand.vmem [shape: f32[8,128], index: 0, kind: input, shape index: {}]
  %s1 = inlined_call_operand.vmem [shape: bf16[128,64], index: 1, kind: input, shape index: {}]
  %s2 = inlined_call_operand.vmem [shape: f32[1,64], index: 2, kind: input, shape index: {}]
  %s3 = inlined_call_operand.vmem [shape: bf16[64,32], index: 3, kind: input, shape index: {}]
  %s4 = inlined_call_operand.vmem [shape: f32[1,32], index: 4, kind: input, shape index: {}]
  %s5 = inlined_call_operand.vmem [shape: bf16[32,16], index: 5, kind: input, shape index: {}]
  %s6 = inlined_call_operand.vmem [shape: f32[1,16], index: 6, kind: input, shape index: {}]
  %s7 = inlined_call_operand.vmem [shape: bf16[16,4], index: 7, kind: input, shape index: {}]
  %s8 = inlined_call_operand.vmem [shape: f32[1,4], index: 8, kind: input, shape index: {}]
  %s9 = inlined_call_operand.vmem [shape: f32[8,4], index: 9, kind: output, shape index: {}]
  %s10 = sld [smem:[#allocation0]]
  $region46: #{tpu_custom_call.1} parent=0
    _
  %s12 = ssub.s32 1, %s10
  %s13 = scalar_select 0, %s12, %s10
  // Predicated region
  $region2: #{tpu_custom_call.1} parent=0 // pred_check
    _
  $region3: #{tpu_custom_call.1} parent=0 // pred_check_branch
    %15 = sbr.rel (0) target = $region5
  $region4: #{tpu_custom_call.1} parent=0 // pred_region
    _
  $region5: #{tpu_custom_call.1} parent=0 // pred_fallthru
    _
  // Predicated region
  $region6: #{tpu_custom_call.1} parent=0 // pred_check
    _
  $region7: #{tpu_custom_call.1} parent=0 // pred_check_branch
    %17 = sbr.rel (0) target = $region9
  $region8: #{tpu_custom_call.1} parent=0 // pred_region
    _
  $region9: #{tpu_custom_call.1} parent=0 // pred_fallthru
    _
  // Predicated region
  $region10: #{tpu_custom_call.1} parent=0 // pred_check
    _
  $region11: #{tpu_custom_call.1} parent=0 // pred_check_branch
    %19 = sbr.rel (0) target = $region13
  $region12: #{tpu_custom_call.1} parent=0 // pred_region
    _
  $region13: #{tpu_custom_call.1} parent=0 // pred_fallthru
    _
  // Predicated region
  $region14: #{tpu_custom_call.1} parent=0 // pred_check
    _
  $region15: #{tpu_custom_call.1} parent=0 // pred_check_branch
    %21 = sbr.rel (0) target = $region17
  $region16: #{tpu_custom_call.1} parent=0 // pred_region
    _
  $region17: #{tpu_custom_call.1} parent=0 // pred_fallthru
    _
  // Predicated region
  $region18: #{tpu_custom_call.1} parent=0 // pred_check
    _
  $region19: #{tpu_custom_call.1} parent=0 // pred_check_branch
    %23 = sbr.rel (0) target = $region21
  $region20: #{tpu_custom_call.1} parent=0 // pred_region
    _
  $region21: #{tpu_custom_call.1} parent=0 // pred_fallthru
    _
  // Predicated region
  $region22: #{tpu_custom_call.1} parent=0 // pred_check
    _
  $region23: #{tpu_custom_call.1} parent=0 // pred_check_branch
    %25 = sbr.rel (0) target = $region25
  $region24: #{tpu_custom_call.1} parent=0 // pred_region
    _
  $region25: #{tpu_custom_call.1} parent=0 // pred_fallthru
    _
  // Predicated region
  $region26: #{tpu_custom_call.1} parent=0 // pred_check
    _
  $region27: #{tpu_custom_call.1} parent=0 // pred_check_branch
    %27 = sbr.rel (0) target = $region29
  $region28: #{tpu_custom_call.1} parent=0 // pred_region
    _
  $region29: #{tpu_custom_call.1} parent=0 // pred_fallthru
    _
  // Predicated region
  $region30: #{tpu_custom_call.1} parent=0 // pred_check
    _
  $region31: #{tpu_custom_call.1} parent=0 // pred_check_branch
    %29 = sbr.rel (0) target = $region33
  $region32: #{tpu_custom_call.1} parent=0 // pred_region
    _
  $region33: #{tpu_custom_call.1} parent=0 // pred_fallthru
    _
  // Predicated region
  $region34: #{tpu_custom_call.1} parent=0 // pred_check
    _
  $region35: #{tpu_custom_call.1} parent=0 // pred_check_branch
    %31 = sbr.rel (0) target = $region37
  $region36: #{tpu_custom_call.1} parent=0 // pred_region
    _
  $region37: #{tpu_custom_call.1} parent=0 // pred_fallthru
    _
  %v33 = vld [vmem:[%s0] sm:$0xff]
  %v34 = vpack.c.bf16 %v33, %v33
  %v35 = vld [vmem:[%s1] sm:$0xf]
  %v36 = vld [vmem:[%s1 + $0x4] sm:$0xf]
  %v37 = vld [vmem:[%s1 + $0x8] sm:$0xf]
  %v38 = vld [vmem:[%s1 + $0xc] sm:$0xf]
  %v39 = vld [vmem:[%s1 + $0x10] sm:$0xf]
  %v40 = vld [vmem:[%s1 + $0x14] sm:$0xf]
  %v41 = vld [vmem:[%s1 + $0x18] sm:$0xf]
  %v42 = vld [vmem:[%s1 + $0x1c] sm:$0xf]
  %v43 = vld [vmem:[%s1 + $0x20] sm:$0xf]
  %v44 = vld [vmem:[%s1 + $0x24] sm:$0xf]
  %v45 = vld [vmem:[%s1 + $0x28] sm:$0xf]
  %v46 = vld [vmem:[%s1 + $0x2c] sm:$0xf]
  %v47 = vld [vmem:[%s1 + $0x30] sm:$0xf]
  %v48 = vld [vmem:[%s1 + $0x34] sm:$0xf]
  %v49 = vld [vmem:[%s1 + $0x38] sm:$0xf]
  %v50 = vld [vmem:[%s1 + $0x3c] sm:$0xf]
  %v51 = vld [vmem:[%s2] sm:$0x1]
  %v53 = vlaneseq
  %v54 = vshrl.u32 %v53, 7
  %v55 = vsub.s32 0, %v54
  %v56 = vrot.slane %v51, %v55
  %v74 = vunpack.c.l.b16 %v35
  %v75 = vunpack.c.l.b16 %v36
  %v76 = vunpack.c.l.b16 %v37
  %v77 = vunpack.c.l.b16 %v38
  %v78 = vunpack.c.l.b16 %v39
  %v79 = vunpack.c.l.b16 %v40
  %v80 = vunpack.c.l.b16 %v41
  %v81 = vunpack.c.l.b16 %v42
  %v82 = vunpack.c.l.b16 %v43
  %v83 = vunpack.c.l.b16 %v44
  %v84 = vunpack.c.l.b16 %v45
  %v85 = vunpack.c.l.b16 %v46
  %v86 = vunpack.c.l.b16 %v47
  %v87 = vunpack.c.l.b16 %v48
  %v88 = vunpack.c.l.b16 %v49
  %v89 = vunpack.c.l.b16 %v50
  %v90 = vpack.c.b16 %v75, %v74
  %v91 = vpack.c.b16 %v77, %v76
  %v92 = vpack.c.b16 %v79, %v78
  %v93 = vpack.c.b16 %v81, %v80
  %v94 = vpack.c.b16 %v83, %v82
  %v95 = vpack.c.b16 %v85, %v84
  %v96 = vpack.c.b16 %v87, %v86
  %v97 = vpack.c.b16 %v89, %v88
  %106 = vmatprep.subr.bf16.mxu0 0
  %107 = vmatpush1.bf16.msra.mxu0 %v90
  %108 = vmatprep.subr.bf16.mxu0 0
  %109 = vmatpush1.bf16.msra.mxu0 %v91
  %110 = vmatprep.subr.bf16.mxu0 0
  %111 = vmatpush1.bf16.msra.mxu0 %v92
  %112 = vmatprep.subr.bf16.mxu0 0
  %113 = vmatpush1.bf16.msra.mxu0 %v93
  %114 = vmatprep.subr.bf16.mxu0 0
  %115 = vmatpush1.bf16.msra.mxu0 %v94
  %116 = vmatprep.subr.bf16.mxu0 0
  %117 = vmatpush1.bf16.msra.mxu0 %v95
  %118 = vmatprep.subr.bf16.mxu0 0
  %119 = vmatpush1.bf16.msra.mxu0 %v96
  %120 = vmatprep.subr.bf16.mxu0 0
  %121 = vmatpush1.bf16.msra.mxu0 %v97
  %122 = vmatprep.subr.bf16.mxu0 0
  %123 = vmatpush1.bf16.msra.mxu0 0
  %124 = vmatprep.subr.bf16.mxu0 0
  %125 = vmatpush1.bf16.msra.mxu0 0
  %126 = vmatprep.subr.bf16.mxu0 0
  %127 = vmatpush1.bf16.msra.mxu0 0
  %128 = vmatprep.subr.bf16.mxu0 0
  %129 = vmatpush1.bf16.msra.mxu0 0
  %130 = vmatprep.subr.bf16.mxu0 0
  %131 = vmatpush1.bf16.msra.mxu0 0
  %132 = vmatprep.subr.bf16.mxu0 0
  %133 = vmatpush1.bf16.msra.mxu0 0
  %134 = vmatprep.subr.bf16.mxu0 0
  %135 = vmatpush1.bf16.msra.mxu0 0
  %136 = vmatprep.subr.bf16.mxu0 0
  %137 = vmatpush1.bf16.msra.mxu0 0
  %138 = vmatprep.mubr.bf16.mxu0 0
  %139 = vmatmul.mubr.bf16.gmra.mrb[0].mxu0 %v34
  %v140 = vpop.f32.mrb[0].mxu0
  %v141 = vadd.f32 %v56, %v140
  %v142 = vpop.f32.mrb[0].mxu0
  %v143 = vpop.f32.mrb[0].mxu0
  %v144 = vpop.f32.mrb[0].mxu0
  %145 = vdwg.mxu0
  %v146 = vmax.f32 %v141, 0.0
  %v147 = vpack.c.bf16 %v146, %v146
  %v148 = vld [vmem:[%s3] sm:$0xf]
  %v149 = vld [vmem:[%s3 + $0x4] sm:$0xf]
  %v150 = vld [vmem:[%s3 + $0x8] sm:$0xf]
  %v151 = vld [vmem:[%s3 + $0xc] sm:$0xf]
  %v152 = vld [vmem:[%s3 + $0x10] sm:$0xf]
  %v153 = vld [vmem:[%s3 + $0x14] sm:$0xf]
  %v154 = vld [vmem:[%s3 + $0x18] sm:$0xf]
  %v155 = vld [vmem:[%s3 + $0x1c] sm:$0xf]
  %v156 = vld [vmem:[%s4] sm:$0x1]
  %v158 = vlaneseq
  %v159 = vshrl.u32 %v158, 7
  %v160 = vsub.s32 0, %v159
  %v161 = vrot.slane %v156, %v160
  %v171 = vunpack.c.l.b16 %v148
  %v172 = vunpack.c.l.b16 %v149
  %v173 = vunpack.c.l.b16 %v150
  %v174 = vunpack.c.l.b16 %v151
  %v175 = vunpack.c.l.b16 %v152
  %v176 = vunpack.c.l.b16 %v153
  %v177 = vunpack.c.l.b16 %v154
  %v178 = vunpack.c.l.b16 %v155
  %v179 = vpack.c.b16 %v172, %v171
  %v180 = vpack.c.b16 %v174, %v173
  %v181 = vpack.c.b16 %v176, %v175
  %v182 = vpack.c.b16 %v178, %v177
  %vm187 = vcmask 523264
  %v189 = vsel %vm187, %v147, 0
  %191 = vmatprep.subr.bf16.mxu0 0
  %192 = vmatpush1.bf16.msra.mxu0 %v179
  %193 = vmatprep.subr.bf16.mxu0 0
  %194 = vmatpush1.bf16.msra.mxu0 %v180
  %195 = vmatprep.subr.bf16.mxu0 0
  %196 = vmatpush1.bf16.msra.mxu0 %v181
  %197 = vmatprep.subr.bf16.mxu0 0
  %198 = vmatpush1.bf16.msra.mxu0 %v182
  %199 = vmatprep.subr.bf16.mxu0 0
  %200 = vmatpush1.bf16.msra.mxu0 0
  %201 = vmatprep.subr.bf16.mxu0 0
  %202 = vmatpush1.bf16.msra.mxu0 0
  %203 = vmatprep.subr.bf16.mxu0 0
  %204 = vmatpush1.bf16.msra.mxu0 0
  %205 = vmatprep.subr.bf16.mxu0 0
  %206 = vmatpush1.bf16.msra.mxu0 0
  %207 = vmatprep.subr.bf16.mxu0 0
  %208 = vmatpush1.bf16.msra.mxu0 0
  %209 = vmatprep.subr.bf16.mxu0 0
  %210 = vmatpush1.bf16.msra.mxu0 0
  %211 = vmatprep.subr.bf16.mxu0 0
  %212 = vmatpush1.bf16.msra.mxu0 0
  %213 = vmatprep.subr.bf16.mxu0 0
  %214 = vmatpush1.bf16.msra.mxu0 0
  %215 = vmatprep.subr.bf16.mxu0 0
  %216 = vmatpush1.bf16.msra.mxu0 0
  %217 = vmatprep.subr.bf16.mxu0 0
  %218 = vmatpush1.bf16.msra.mxu0 0
  %219 = vmatprep.subr.bf16.mxu0 0
  %220 = vmatpush1.bf16.msra.mxu0 0
  %221 = vmatprep.subr.bf16.mxu0 0
  %222 = vmatpush1.bf16.msra.mxu0 0
  %223 = vmatprep.mubr.bf16.mxu0 0
  %224 = vmatmul.mubr.bf16.gmra.mrb[0].mxu0 %v189
  %v225 = vpop.f32.mrb[0].mxu0
  %v226 = vadd.f32 %v161, %v225
  %v227 = vpop.f32.mrb[0].mxu0
  %v228 = vpop.f32.mrb[0].mxu0
  %v229 = vpop.f32.mrb[0].mxu0
  %230 = vdwg.mxu0
  %v231 = vmax.f32 %v226, 0.0
  %v232 = vpack.c.bf16 %v231, %v231
  %v233 = vld [vmem:[%s5] sm:$0xf]
  %v234 = vld [vmem:[%s5 + $0x4] sm:$0xf]
  %v235 = vld [vmem:[%s5 + $0x8] sm:$0xf]
  %v236 = vld [vmem:[%s5 + $0xc] sm:$0xf]
  %v237 = vld [vmem:[%s6] sm:$0x1]
  %v239 = vlaneseq
  %v240 = vshrl.u32 %v239, 7
  %v241 = vsub.s32 0, %v240
  %v242 = vrot.slane %v237, %v241
  %v248 = vunpack.c.l.b16 %v233
  %v249 = vunpack.c.l.b16 %v234
  %v250 = vunpack.c.l.b16 %v235
  %v251 = vunpack.c.l.b16 %v236
  %v252 = vpack.c.b16 %v249, %v248
  %v253 = vpack.c.b16 %v251, %v250
  %vm256 = vcmask 261120
  %v258 = vsel %vm256, %v232, 0
  %260 = vmatprep.subr.bf16.mxu0 0
  %261 = vmatpush1.bf16.msra.mxu0 %v252
  %262 = vmatprep.subr.bf16.mxu0 0
  %263 = vmatpush1.bf16.msra.mxu0 %v253
  %264 = vmatprep.subr.bf16.mxu0 0
  %265 = vmatpush1.bf16.msra.mxu0 0
  %266 = vmatprep.subr.bf16.mxu0 0
  %267 = vmatpush1.bf16.msra.mxu0 0
  %268 = vmatprep.subr.bf16.mxu0 0
  %269 = vmatpush1.bf16.msra.mxu0 0
  %270 = vmatprep.subr.bf16.mxu0 0
  %271 = vmatpush1.bf16.msra.mxu0 0
  %272 = vmatprep.subr.bf16.mxu0 0
  %273 = vmatpush1.bf16.msra.mxu0 0
  %274 = vmatprep.subr.bf16.mxu0 0
  %275 = vmatpush1.bf16.msra.mxu0 0
  %276 = vmatprep.subr.bf16.mxu0 0
  %277 = vmatpush1.bf16.msra.mxu0 0
  %278 = vmatprep.subr.bf16.mxu0 0
  %279 = vmatpush1.bf16.msra.mxu0 0
  %280 = vmatprep.subr.bf16.mxu0 0
  %281 = vmatpush1.bf16.msra.mxu0 0
  %282 = vmatprep.subr.bf16.mxu0 0
  %283 = vmatpush1.bf16.msra.mxu0 0
  %284 = vmatprep.subr.bf16.mxu0 0
  %285 = vmatpush1.bf16.msra.mxu0 0
  %286 = vmatprep.subr.bf16.mxu0 0
  %287 = vmatpush1.bf16.msra.mxu0 0
  %288 = vmatprep.subr.bf16.mxu0 0
  %289 = vmatpush1.bf16.msra.mxu0 0
  %290 = vmatprep.subr.bf16.mxu0 0
  %291 = vmatpush1.bf16.msra.mxu0 0
  %292 = vmatprep.mubr.bf16.mxu0 0
  %293 = vmatmul.mubr.bf16.gmra.mrb[0].mxu0 %v258
  %v294 = vpop.f32.mrb[0].mxu0
  %v295 = vadd.f32 %v242, %v294
  %v296 = vpop.f32.mrb[0].mxu0
  %v297 = vpop.f32.mrb[0].mxu0
  %v298 = vpop.f32.mrb[0].mxu0
  %299 = vdwg.mxu0
  %v300 = vmax.f32 %v295, 0.0
  %v301 = vpack.c.bf16 %v300, %v300
  %v302 = vld [vmem:[%s7] sm:$0xf]
  %v303 = vld [vmem:[%s7 + $0x4] sm:$0xf]
  %v304 = vld [vmem:[%s8] sm:$0x1]
  %v306 = vlaneseq
  %v307 = vshrl.u32 %v306, 7
  %v308 = vsub.s32 0, %v307
  %v309 = vrot.slane %v304, %v308
  %v313 = vunpack.c.l.b16 %v302
  %v314 = vunpack.c.l.b16 %v303
  %v315 = vpack.c.b16 %v314, %v313
  %vm317 = vcmask 130048
  %v319 = vsel %vm317, %v301, 0
  %321 = vmatprep.subr.bf16.mxu0 0
  %322 = vmatpush1.bf16.msra.mxu0 %v315
  %323 = vmatprep.subr.bf16.mxu0 0
  %324 = vmatpush1.bf16.msra.mxu0 0
  %325 = vmatprep.subr.bf16.mxu0 0
  %326 = vmatpush1.bf16.msra.mxu0 0
  %327 = vmatprep.subr.bf16.mxu0 0
  %328 = vmatpush1.bf16.msra.mxu0 0
  %329 = vmatprep.subr.bf16.mxu0 0
  %330 = vmatpush1.bf16.msra.mxu0 0
  %331 = vmatprep.subr.bf16.mxu0 0
  %332 = vmatpush1.bf16.msra.mxu0 0
  %333 = vmatprep.subr.bf16.mxu0 0
  %334 = vmatpush1.bf16.msra.mxu0 0
  %335 = vmatprep.subr.bf16.mxu0 0
  %336 = vmatpush1.bf16.msra.mxu0 0
  %337 = vmatprep.subr.bf16.mxu0 0
  %338 = vmatpush1.bf16.msra.mxu0 0
  %339 = vmatprep.subr.bf16.mxu0 0
  %340 = vmatpush1.bf16.msra.mxu0 0
  %341 = vmatprep.subr.bf16.mxu0 0
  %342 = vmatpush1.bf16.msra.mxu0 0
  %343 = vmatprep.subr.bf16.mxu0 0
  %344 = vmatpush1.bf16.msra.mxu0 0
  %345 = vmatprep.subr.bf16.mxu0 0
  %346 = vmatpush1.bf16.msra.mxu0 0
  %347 = vmatprep.subr.bf16.mxu0 0
  %348 = vmatpush1.bf16.msra.mxu0 0
  %349 = vmatprep.subr.bf16.mxu0 0
  %350 = vmatpush1.bf16.msra.mxu0 0
  %351 = vmatprep.subr.bf16.mxu0 0
  %352 = vmatpush1.bf16.msra.mxu0 0
  %353 = vmatprep.mubr.bf16.mxu0 0
  %354 = vmatmul.mubr.bf16.gmra.mrb[0].mxu0 %v319
  %v355 = vpop.f32.mrb[0].mxu0
  %v356 = vadd.f32 %v309, %v355
  %v357 = vpop.f32.mrb[0].mxu0
  %v358 = vpop.f32.mrb[0].mxu0
  %v359 = vpop.f32.mrb[0].mxu0
  %360 = vdwg.mxu0
  %v361 = vxor.u32 %v356, 2147483648
  %v362 = vmul.f32 %v361, 1.442695
  %v363 = vpow.pop %v362
  %v364 = vadd.f32 %v363, 1.0
  %v365 = vrcp.pop %v364
  %v366 = vmul.f32 1.0, %v365
  %vm367 = vcmask 31744
  %368 = vst.msk [vmem:[%s9] sm:$0xff] %vm367, %v366
  // Predicated region
  $region38: #{tpu_custom_call.1} parent=0 // pred_check
    _
  $region39: #{tpu_custom_call.1} parent=0 // pred_check_branch
    %370 = sbr.rel (0) target = $region41
  $region40: #{tpu_custom_call.1} parent=0 // pred_region
    _
  $region41: #{tpu_custom_call.1} parent=0 // pred_fallthru
    _
  // Predicated region
  $region42: #{tpu_custom_call.1} parent=0 // pred_check
    _
  $region43: #{tpu_custom_call.1} parent=0 // pred_check_branch
    %372 = sbr.rel (0) target = $region45
  $region44: #{tpu_custom_call.1} parent=0 // pred_region
    _
  $region45: #{tpu_custom_call.1} parent=0 // pred_fallthru
    _

</llo_original>
